<compile_context>
chip_gen: v5e
topology: v5e:2x2
jax: 0.10.0
libtpu: 0.0.40
codegen_flags: <defaults>
</compile_context>

<pallas_src>
import functools

import jax
import jax.numpy as jnp
from jax.experimental import pallas as pl
from jax.experimental.pallas import tpu as pltpu


def _patch_embed_kernel(x_ref, w_ref, b_ref, o_ref):
    # x_ref: (tm, K) bf16, w_ref: (K, N) bf16, b_ref: (1, N) f32, o_ref: (tm, N) f32
    acc = jnp.dot(x_ref[...], w_ref[...], preferred_element_type=jnp.float32)
    o_ref[...] = (acc + b_ref[...]).astype(o_ref.dtype)


def _round_up(x, m):
    return ((x + m - 1) // m) * m


def _choose_tm(M, K, N):
    """Largest row tile that fits a conservative VMEM budget (double-buffered)."""
    in_b, out_b = 2, 4                               # bf16 inputs, f32 output
    budget = 24 * 1024 * 1024                        # headroom under 32 MiB scoped
    resident = 2 * K * N * in_b + 2 * N * out_b      # weight (2 bufs) + bias (2 bufs)
    cap = max(8, _round_up(M, 8))
    for cand in (1024, 512, 256, 128, 64, 32, 16, 8):
        if cand > cap:
            continue
        # double-buffered input/output tiles
        per_tile = 2 * cand * K * in_b + 2 * cand * N * out_b
        if resident + per_tile <= budget:
            return cand
    return 8


def _patch_project(x_mat, w_mat, bias, tm):
    M, K = x_mat.shape
    _, N = w_mat.shape
    grid = (pl.cdiv(M, tm),)
    cost = pl.CostEstimate(
        flops=2 * M * K * N,
        transcendentals=0,
        bytes_accessed=M * K * 2 + K * N * 2 + N * 4 + M * N * 4,
    )
    return pl.pallas_call(
        _patch_embed_kernel,
        out_shape=jax.ShapeDtypeStruct((M, N), jnp.float32),
        grid_spec=pltpu.PrefetchScalarGridSpec(
            num_scalar_prefetch=0,
            grid=grid,
            in_specs=[
                pl.BlockSpec((tm, K), lambda i: (i, 0)),   # patch-row tile
                pl.BlockSpec((K, N), lambda i: (0, 0)),    # full weight, resident
                pl.BlockSpec((1, N), lambda i: (0, 0)),    # bias, resident
            ],
            out_specs=pl.BlockSpec((tm, N), lambda i: (i, 0)),
        ),
        compiler_params=pltpu.CompilerParams(
            dimension_semantics=("parallel",),
            vmem_limit_bytes=32 * 1024 * 1024,
            allow_input_fusion=[True, False, False],
        ),
        cost_estimate=cost,
    )(x_mat, w_mat, bias)


@functools.partial(jax.jit, static_argnames=("patch_size",))
def _patch_embed_forward(x, w_mat, bias, *, patch_size):
    B, C, T, H, W = x.shape
    ph, pw = patch_size
    nph, npw = H // ph, W // pw
    K = C * ph * pw
    N = w_mat.shape[1]
    M = B * T * nph * npw

    # Fused 'b c t h w -> (b t nph npw) (c ph pw)' im2col: one 7-D transpose
    # (fusible into the kernel's input DMA via allow_input_fusion).
    x7 = x.reshape(B, C, T, nph, ph, npw, pw)
    x7 = jnp.transpose(x7, (0, 2, 3, 5, 1, 4, 6))          # (B,T,nph,npw,C,ph,pw)
    x_mat = x7.reshape(M, K).astype(jnp.bfloat16)

    tm = _choose_tm(M, K, N)
    out = _patch_project(x_mat, w_mat, bias, tm)           # (M, N) f32
    return out.reshape(B * T, nph * npw, N)


class PatchEmbedPallas:
    """JAX/Pallas equivalent of mmaction2 TimeSformer PatchEmbed."""

    def __init__(self, img_size, patch_size, in_channels=3, embed_dims=768,
                 key=jax.random.PRNGKey(0)):
        self.img_size = (img_size, img_size) if isinstance(img_size, int) else tuple(img_size)
        self.patch_size = (patch_size, patch_size) if isinstance(patch_size, int) else tuple(patch_size)
        num_patches = (self.img_size[1] // self.patch_size[1]) * \
                      (self.img_size[0] // self.patch_size[0])
        assert num_patches * self.patch_size[0] * self.patch_size[1] == \
            self.img_size[0] * self.img_size[1], \
            'The image size H*W must be divisible by patch size'
        self.num_patches = num_patches
        self.in_channels = in_channels
        self.embed_dims = embed_dims

        # Deterministic kaiming_init(mode='fan_in', nonlinearity='linear'):
        # normal(0, 1/sqrt(fan_in)), fan_in = C*ph*pw; bias = 0.
        ph, pw = self.patch_size
        fan_in = in_channels * ph * pw
        std = 1.0 / float(fan_in) ** 0.5
        # PyTorch conv weight shape: (embed_dims, in_channels, ph, pw)
        w = jax.random.normal(key, (embed_dims, in_channels, ph, pw), jnp.float32) * std
        # Kernel layout: (K, N) with K ordered (c, ph, pw); stored bf16 for the MXU.
        self.w_mat = jnp.transpose(w.reshape(embed_dims, fan_in), (1, 0)).astype(jnp.bfloat16)
        self.bias = jnp.zeros((1, embed_dims), jnp.float32)

    def __call__(self, x):
        # x: (B, C, T, H, W) float32
        B, C, T, H, W = x.shape
        assert (H, W) == self.img_size and C == self.in_channels
        return _patch_embed_forward(x, self.w_mat, self.bias,
                                    patch_size=self.patch_size)


if __name__ == "__main__":
    key = jax.random.PRNGKey(0)
    k_w, k_x = jax.random.split(key)

    # Small demo shapes: B=2, C=3, T=2, H=W=16, patch=8, embed_dims=32.
    # (Production: embed_dims=768 keeps the output last dim lane-dense >= 128.)
    B, C, T, H, W = 2, 3, 2, 16, 16
    patch = 8
    embed_dims = 32

    module = PatchEmbedPallas(img_size=H, patch_size=patch,
                              in_channels=C, embed_dims=embed_dims, key=k_w)
    x = jax.random.normal(k_x, (B, C, T, H, W), jnp.float32)

    out = jax.block_until_ready(module(x))

    expected_shape = (B * T, module.num_patches, embed_dims)
    assert out.shape == expected_shape, (out.shape, expected_shape)

    # Plain-JAX reference with the same bf16-rounded inputs + f32 accumulate.
    nph, npw = H // patch, W // patch
    xr = x.reshape(B, C, T, nph, patch, npw, patch)
    xr = jnp.transpose(xr, (0, 2, 3, 5, 1, 4, 6)).reshape(B * T * nph * npw, -1)
    xr = xr.astype(jnp.bfloat16).astype(jnp.float32)
    ref = xr @ module.w_mat.astype(jnp.float32) + module.bias
    ref = ref.reshape(expected_shape)
    max_err = float(jnp.max(jnp.abs(out.astype(jnp.float32) - ref)))
    assert max_err < 5e-2, f"max abs err {max_err}"

    print("KERNEL_OK")
</pallas_src>

<mosaic_0001>
module attributes {stable_mosaic.version = 11 : i64} {
  func.func @_patch_embed_kernel(%arg0: i32, %arg1: memref<16x192xbf16, #tpu.memory_space<vmem>>, %arg2: memref<192x32xbf16, #tpu.memory_space<vmem>>, %arg3: memref<1x32xf32, #tpu.memory_space<vmem>>, %arg4: memref<16x32xf32, #tpu.memory_space<vmem>>) attributes {dimension_semantics = [#tpu.dimension_semantics<parallel>], iteration_bounds = array<i64: 1>, scalar_prefetch = 0 : i64, scratch_operands = 0 : i64, tpu.core_type = #tpu.core_type<tc>, window_params = [{transform_indices = @transform_0, window_bounds = array<i64: 16, 192>}, {pipeline_mode = #tpu.pipeline_mode<synchronous>, transform_indices = @transform_1, window_bounds = array<i64: 192, 32>}, {pipeline_mode = #tpu.pipeline_mode<synchronous>, transform_indices = @transform_2, window_bounds = array<i64: 1, 32>}, {transform_indices = @transform_3, window_bounds = array<i64: 16, 32>}]} {
    %c0 = arith.constant 0 : index
    %c0_0 = arith.constant 0 : index
    %0 = vector.load %arg1[%c0, %c0_0] : memref<16x192xbf16, #tpu.memory_space<vmem>>, vector<16x192xbf16>
    %c0_1 = arith.constant 0 : index
    %c0_2 = arith.constant 0 : index
    %1 = vector.load %arg2[%c0_1, %c0_2] : memref<192x32xbf16, #tpu.memory_space<vmem>>, vector<192x32xbf16>
    %cst = arith.constant dense<0.000000e+00> : vector<16x32xf32>
    %2 = tpu.matmul %0, %1, %cst {dimension_numbers = #tpu.dot_dimension_numbers<[1], [0], [0], [1], [0, 0, 1, 1], [], []>} : vector<16x192xbf16>, vector<192x32xbf16>, vector<16x32xf32> -> vector<16x32xf32>
    %c0_3 = arith.constant 0 : index
    %c0_4 = arith.constant 0 : index
    %3 = vector.load %arg3[%c0_3, %c0_4] : memref<1x32xf32, #tpu.memory_space<vmem>>, vector<1x32xf32>
    %4 = vector.broadcast %3 : vector<1x32xf32> to vector<16x32xf32>
    %5 = arith.addf %2, %4 : vector<16x32xf32>
    %c0_5 = arith.constant 0 : index
    %c0_6 = arith.constant 0 : index
    %6 = vector.load %arg4[%c0_5, %c0_6] : memref<16x32xf32, #tpu.memory_space<vmem>>, vector<16x32xf32>
    tpu.vector_store %arg4[%c0_5, %c0_6], %5 {strides = array<i32>} : memref<16x32xf32, #tpu.memory_space<vmem>>, vector<16x32xf32>,
    return
  }
  func.func @transform_0(%arg0: i32) -> (i32, i32) {
    %c0_i32 = arith.constant 0 : i32
    %c0_i32_0 = arith.constant 0 : i32
    return %arg0, %c0_i32 : i32, i32
  }
  func.func @transform_1(%arg0: i32) -> (i32, i32) {
    %c0_i32 = arith.constant 0 : i32
    %c0_i32_0 = arith.constant 0 : i32
    %c0_i32_1 = arith.constant 0 : i32
    return %c0_i32, %c0_i32_0 : i32, i32
  }
  func.func @transform_2(%arg0: i32) -> (i32, i32) {
    %c0_i32 = arith.constant 0 : i32
    %c0_i32_0 = arith.constant 0 : i32
    %c0_i32_1 = arith.constant 0 : i32
    return %c0_i32, %c0_i32_0 : i32, i32
  }
  func.func @transform_3(%arg0: i32) -> (i32, i32) {
    %c0_i32 = arith.constant 0 : i32
    %c0_i32_0 = arith.constant 0 : i32
    return %arg0, %c0_i32 : i32, i32
  }
}

</mosaic_0001>

<llo_original>
// kernel: _patch_embed_forward.1
$region0: #{_patch_embed_forward.1}
  #allocation0 [shape = 'u32[]', space=smem, size = 0x4, offset = 0x4, fixed_abs, tag = 'smem constant byte address 0x4 - core index']
  #allocation1 [shape = 'u32[72,128]{1,0:T(1,128)}', space=vmem, size = 0x9000, scoped, tag = 'internal scratch']
  %s0 = inlined_call_operand.vmem [shape: bf16[16,192], index: 0, kind: input, shape index: {}]
  %s1 = inlined_call_operand.vmem [shape: bf16[192,32], index: 1, kind: input, shape index: {}]
  %s2 = inlined_call_operand.vmem [shape: f32[1,32], index: 2, kind: input, shape index: {}]
  %s3 = inlined_call_operand.hbm [shape: f32[16,32], index: 3, kind: output, shape index: {}]
  %s4 = sld [smem:[#allocation0]]
  $region22: #{_patch_embed_forward.1} parent=0
    _
  %s6 = ssub.s32 1, %s4
  %s7 = scalar_select 0, %s6, %s4
  $region1: #{_patch_embed_forward.1} parent=0
    #allocation2 [shape = 'u8[8192]{0}', space=vmem, size = 0x2000, scoped, tag = 'output window, operand 0, single buffered']
    #allocation3 [shape = 's32[1]{0}', space=sflag, size = 0x4, scoped, tag = 'scoped memory for _patch_embed_forward.1']
    %8 = vsyncpa [#allocation3], 0
    // Predicated region
    $region2: #{_patch_embed_forward.1} parent=1 // pred_check
      _
    $region3: #{_patch_embed_forward.1} parent=1 // pred_check_branch
      %10 = sbr.rel (0) target = $region5
    $region4: #{_patch_embed_forward.1} parent=1 // pred_region
      _
    $region5: #{_patch_embed_forward.1} parent=1 // pred_fallthru
      _
    // Predicated region
    $region6: #{_patch_embed_forward.1} parent=1 // pred_check
      _
    $region7: #{_patch_embed_forward.1} parent=1 // pred_check_branch
      %12 = sbr.rel (0) target = $region9
    $region8: #{_patch_embed_forward.1} parent=1 // pred_region
      _
    $region9: #{_patch_embed_forward.1} parent=1 // pred_fallthru
      _
    // Predicated region
    $region10: #{_patch_embed_forward.1} parent=1 // pred_check
      _
    $region11: #{_patch_embed_forward.1} parent=1 // pred_check_branch
      %14 = sbr.rel (0) target = $region13
    $region12: #{_patch_embed_forward.1} parent=1 // pred_region
      _
    $region13: #{_patch_embed_forward.1} parent=1 // pred_fallthru
      _
    %v16 = vld [vmem:[%s0] sm:$0xff]
    %v17 = vld [vmem:[%s0 + $0x8] sm:$0xff]
    %v18 = vld [vmem:[%s1] sm:$0xf]
    %v19 = vld [vmem:[%s1 + $0x4] sm:$0xf]
    %v20 = vld [vmem:[%s1 + $0x8] sm:$0xf]
    %v21 = vld [vmem:[%s1 + $0xc] sm:$0xf]
    %v22 = vld [vmem:[%s1 + $0x10] sm:$0xf]
    %v23 = vld [vmem:[%s1 + $0x14] sm:$0xf]
    %v24 = vld [vmem:[%s1 + $0x18] sm:$0xf]
    %v25 = vld [vmem:[%s1 + $0x1c] sm:$0xf]
    %v26 = vld [vmem:[%s1 + $0x20] sm:$0xf]
    %v27 = vld [vmem:[%s1 + $0x24] sm:$0xf]
    %v28 = vld [vmem:[%s1 + $0x28] sm:$0xf]
    %v29 = vld [vmem:[%s1 + $0x2c] sm:$0xf]
    %v30 = vld [vmem:[%s1 + $0x30] sm:$0xf]
    %v31 = vld [vmem:[%s1 + $0x34] sm:$0xf]
    %v32 = vld [vmem:[%s1 + $0x38] sm:$0xf]
    %v33 = vld [vmem:[%s1 + $0x3c] sm:$0xf]
    %v34 = vld [vmem:[%s1 + $0x40] sm:$0xf]
    %v35 = vld [vmem:[%s1 + $0x44] sm:$0xf]
    %v36 = vld [vmem:[%s1 + $0x48] sm:$0xf]
    %v37 = vld [vmem:[%s1 + $0x4c] sm:$0xf]
    %v38 = vld [vmem:[%s1 + $0x50] sm:$0xf]
    %v39 = vld [vmem:[%s1 + $0x54] sm:$0xf]
    %v40 = vld [vmem:[%s1 + $0x58] sm:$0xf]
    %v41 = vld [vmem:[%s1 + $0x5c] sm:$0xf]
    %v42 = vld [vmem:[%s2] sm:$0x1]
    %v44 = vperm.slane %v42, 0
    %v48 = vunpack.c.l.b16 %v16
    %v49 = vunpack.c.h.b16 %v16
    %v50 = vunpack.c.l.b16 %v17
    %v51 = vunpack.c.h.b16 %v17
    %v52 = vpack.c.b16 %v50, %v48
    %v53 = vpack.c.b16 %v51, %v49
    %v79 = vunpack.c.l.b16 %v18
    %v80 = vunpack.c.l.b16 %v19
    %v81 = vunpack.c.l.b16 %v20
    %v82 = vunpack.c.l.b16 %v21
    %v83 = vunpack.c.l.b16 %v22
    %v84 = vunpack.c.l.b16 %v23
    %v85 = vunpack.c.l.b16 %v24
    %v86 = vunpack.c.l.b16 %v25
    %v87 = vunpack.c.l.b16 %v26
    %v88 = vunpack.c.l.b16 %v27
    %v89 = vunpack.c.l.b16 %v28
    %v90 = vunpack.c.l.b16 %v29
    %v91 = vunpack.c.l.b16 %v30
    %v92 = vunpack.c.l.b16 %v31
    %v93 = vunpack.c.l.b16 %v32
    %v94 = vunpack.c.l.b16 %v33
    %v95 = vunpack.c.l.b16 %v34
    %v96 = vunpack.c.l.b16 %v35
    %v97 = vunpack.c.l.b16 %v36
    %v98 = vunpack.c.l.b16 %v37
    %v99 = vunpack.c.l.b16 %v38
    %v100 = vunpack.c.l.b16 %v39
    %v101 = vunpack.c.l.b16 %v40
    %v102 = vunpack.c.l.b16 %v41
    %v103 = vpack.c.b16 %v80, %v79
    %v104 = vpack.c.b16 %v82, %v81
    %v105 = vpack.c.b16 %v84, %v83
    %v106 = vpack.c.b16 %v86, %v85
    %v107 = vpack.c.b16 %v88, %v87
    %v108 = vpack.c.b16 %v90, %v89
    %v109 = vpack.c.b16 %v92, %v91
    %v110 = vpack.c.b16 %v94, %v93
    %v111 = vpack.c.b16 %v96, %v95
    %v112 = vpack.c.b16 %v98, %v97
    %v113 = vpack.c.b16 %v100, %v99
    %v114 = vpack.c.b16 %v102, %v101
    %vm127 = vcmask 523264
    %v129 = vsel %vm127, %v53, 0
    %131 = vmatpush.bf16.msra.mxu0 %v110
    %132 = vmatpush.bf16.msra.mxu0 %v109
    %133 = vmatpush.bf16.msra.mxu0 %v108
    %134 = vmatpush.bf16.msra.mxu0 %v107
    %135 = vmatpush.bf16.msra.mxu0 %v106
    %136 = vmatpush.bf16.msra.mxu0 %v105
    %137 = vmatpush.bf16.msra.mxu0 %v104
    %138 = vmatpush.bf16.msra.mxu0 %v103
    %139 = vmatmul.bf16.gmra.mxu0 %v52
    %v140 = vpop.f32.mrf.mxu0
    %v141 = vadd.f32 %v44, %v140
    %v142 = vpop.f32.mrf.mxu0
    %v143 = vadd.f32 %v44, %v142
    %144 = vdwg.mxu0
    %145 = vmatpush.bf16.msra.mxu0 0
    %146 = vmatpush.bf16.msra.mxu0 0
    %147 = vmatpush.bf16.msra.mxu0 0
    %148 = vmatpush.bf16.msra.mxu0 0
    %149 = vmatpush.bf16.msra.mxu0 %v114
    %150 = vmatpush.bf16.msra.mxu0 %v113
    %151 = vmatpush.bf16.msra.mxu0 %v112
    %152 = vmatpush.bf16.msra.mxu0 %v111
    %153 = vmatmul.bf16.gmra.mxu0 %v129
    %v154 = vpop.f32.mrf.mxu0
    %v155 = vadd.f32 %v141, %v154
    %v156 = vpop.f32.mrf.mxu0
    %v157 = vadd.f32 %v143, %v156
    %158 = vdwg.mxu0
    %vm159 = vcmask 261120
    %160 = vst.msk [vmem:[#allocation2] sm:$0xff] %vm159, %v155
    %161 = vst.msk [vmem:[#allocation2 + $0x8] sm:$0xff] %vm159, %v157
    // Predicated region
    $region14: #{_patch_embed_forward.1} parent=1 // pred_check
      _
    $region15: #{_patch_embed_forward.1} parent=1 // pred_check_branch
      %163 = sbr.rel (0) target = $region17
    $region16: #{_patch_embed_forward.1} parent=1 // pred_region
      %165 = vsyncadd [#allocation3], 0
      %s166 = sshll.u32 [#allocation2], 4
      %s167 = int_to_ptr.vmem [resolvable:$true] %s166
      %s168 = sshll.u32 %s3, 4
      %s169 = int_to_ptr.hbm [resolvable:$true] %s168
      %174 = dma.vmem_to_hbm [thread:$0]  %s167, 256, %s169, [#allocation3], 128, 128, 8
    $region17: #{_patch_embed_forward.1} parent=1 // pred_fallthru
      _
    // Predicated region
    $region18: #{_patch_embed_forward.1} parent=1 // pred_check
      _
    $region19: #{_patch_embed_forward.1} parent=1 // pred_check_branch
      %176 = sbr.rel (0) target = $region21
    $region20: #{_patch_embed_forward.1} parent=1 // pred_region
      %178 = dma.done [#allocation3], 256
    $region21: #{_patch_embed_forward.1} parent=1 // pred_fallthru
      _
    %179 = vsyncpa [#allocation3], 1

</llo_original>
